<compile_context>
chip_gen: v5e
topology: v5e:2x2
jax: 0.10.0
libtpu: 0.0.40
codegen_flags: <defaults>
</compile_context>

<pallas_src>
import functools

import numpy as np
import jax
import jax.numpy as jnp
from jax import lax
from jax.experimental import pallas as pl
from jax.experimental.pallas import tpu as pltpu


def _basic_block_kernel(x_ref, w1_ref, w2_ref, m_ref, out_ref, patch_ref, *, W, C):
    """Fused conv3x3+BN+ReLU -> conv3x3+BN -> +identity -> ReLU on a batch-block.

    x_ref:     (C, B*P)     channels-first, B images concatenated along the lane axis
    w1_ref:    (C, 9*C+1)   conv1 weight with BN1 scale folded in + folded-bias column
    w2_ref:    (C, 9*C+1)   conv2 weight with BN2 scale folded in + folded-bias column
    m_ref:     (9, B*P)     0/1 tap-validity masks (padding=1 semantics), tiled per image
    out_ref:   (C, B*P)
    patch_ref: (9*C+1, B*P) VMEM scratch: im2col patch + constant ones row for the bias
    """
    lanes = x_ref.shape[-1]
    x = x_ref[...]                          # f32 (C, B*P); also the residual identity
    masks = m_ref[...]                      # f32 (9, B*P)
    p_dtype = patch_ref.dtype

    # Constant ones row: the folded-bias column of the weights rides the MXU for free.
    patch_ref[pl.ds(9 * C, 1), :] = jnp.ones((1, lanes), dtype=p_dtype)

    def conv_bn(src, w_ref):
        # im2col via XLU lane rotations: tap (dy, dx) is a flat shift by t = dy*W + dx.
        # Out-of-image (and, for B > 1, cross-image) contributions are zeroed by the mask,
        # reproducing zero-padding exactly.  Masked taps are written straight into the
        # VMEM patch scratch (no sub-8-sublane concatenate relayout).
        for dy in (-1, 0, 1):
            for dx in (-1, 0, 1):
                k = (dy + 1) * 3 + (dx + 1)
                t = dy * W + dx
                if t == 0:
                    tap = src                                   # center tap: always valid
                else:
                    shifted = pltpu.roll(src, shift=(-t) % lanes, axis=1)
                    tap = shifted * masks[k:k + 1, :]
                patch_ref[pl.ds(k * C, C), :] = tap.astype(p_dtype)
        # One MXU matmul with K = 9*C + 1 (bias folded in), f32 accumulation.
        return jnp.dot(w_ref[...], patch_ref[...],
                       preferred_element_type=jnp.float32)      # (C, B*P) f32

    y1 = jnp.maximum(conv_bn(x, w1_ref), 0.0)        # relu(bn1(conv1(x)))
    y2 = conv_bn(y1, w2_ref) + x                     # bn2(conv2(.)) + identity
    out_ref[...] = jnp.maximum(y2, 0.0).astype(out_ref.dtype)


# ---------------------------------------------------------------------------
# Wrapper-side folding / layout plumbing
# ---------------------------------------------------------------------------
def _fold_bn(gamma, beta, mean, var, eps=1e-5):
    scale = gamma / jnp.sqrt(var + eps)
    return scale, beta - mean * scale


def _fold_weight_bias(w_oihw, scale, bias, dtype):
    """OIHW conv weight -> (Cout, 9*Cin + 1): BN scale folded in, tap-major columns,
    folded BN bias appended as the last column (pairs with the patch's ones row)."""
    w = w_oihw * scale[:, None, None, None]
    cout, cin = w.shape[0], w.shape[1]
    w_flat = jnp.transpose(w, (0, 2, 3, 1)).reshape(cout, 9 * cin)
    return jnp.concatenate([w_flat, bias[:, None]], axis=1).astype(dtype)


def _tap_masks(H, W, batch_block):
    """(9, B*H*W) float32 validity masks implementing 1-pixel zero padding per image."""
    rows = np.arange(H)[:, None]
    cols = np.arange(W)[None, :]
    ms = []
    for dy in (-1, 0, 1):
        for dx in (-1, 0, 1):
            m = ((rows + dy >= 0) & (rows + dy < H) &
                 (cols + dx >= 0) & (cols + dx < W))
            ms.append(m.reshape(-1))
    masks = np.stack(ms).astype(np.float32)                 # (9, H*W)
    return jnp.asarray(np.tile(masks, (1, batch_block)))    # (9, B*H*W)


def _step_vmem_bytes(C, lanes, patch_itemsize):
    io = 2 * 2 * C * lanes * 4                 # x + out blocks, double-buffered, f32
    msk = 2 * 9 * lanes * 4                    # tap masks, double-buffered
    patch = (9 * C + 1) * lanes * patch_itemsize
    wgt = 2 * 2 * C * (9 * C + 1) * patch_itemsize
    return io + msk + patch + wgt


def _pick_batch_block(N, C, P, patch_itemsize, budget_bytes):
    best = 1
    for b in range(1, N + 1):
        if N % b:
            continue
        if (b * P) % 128 != 0 and b != N:      # block lane width must stay 128-aligned
            continue
        if _step_vmem_bytes(C, b * P, patch_itemsize) <= budget_bytes:
            best = b
    return best


def basic_block_forward(x_nchw, params, *, batch_block=None, mxu_dtype=jnp.float32,
                        vmem_budget_bytes=24 * 1024 * 1024):
    """BasicBlock(in_c, out_c, stride=1, downsample=None).forward, eval-mode BN.

    batch_block: images folded into the matmul lane axis per grid step.  None -> largest
      divisor of N whose working set fits `vmem_budget_bytes` (conservative for v7x's
      64 MiB VMEM).  On v7x prefer N//2 so the "parallel" grid feeds both TensorCores;
      on v5e/v6e maximize it.
    mxu_dtype: dtype of the folded weights / im2col patch fed to the MXU (use jnp.bfloat16
      at real ResNet channel counts; roll/mask elementwise math stays f32 either way).
    """
    N, C, H, W = x_nchw.shape
    P = H * W
    assert params["w1"].shape == (C, C, 3, 3) and params["w2"].shape == (C, C, 3, 3), \
        "stride=1 / downsample=None path requires Cin == Cout"
    itemsize = np.dtype(mxu_dtype).itemsize
    if batch_block is None:
        batch_block = _pick_batch_block(N, C, P, itemsize, vmem_budget_bytes)
    B = batch_block
    assert N % B == 0, "batch_block must divide the batch size"
    lanes = B * P
    assert lanes % 128 == 0 or B == N, "block lane width must be a multiple of 128"

    s1, b1 = _fold_bn(params["bn1_gamma"], params["bn1_beta"],
                      params["bn1_mean"], params["bn1_var"])
    s2, b2 = _fold_bn(params["bn2_gamma"], params["bn2_beta"],
                      params["bn2_mean"], params["bn2_var"])
    w1f = _fold_weight_bias(params["w1"], s1, b1, mxu_dtype)   # (C, 9C+1)
    w2f = _fold_weight_bias(params["w2"], s2, b2, mxu_dtype)   # (C, 9C+1)
    masks = _tap_masks(H, W, B)                                # (9, B*P)

    # Channels-first lane-dense slab: (N, C, H, W) -> (C, N*H*W).  Wrapper-side layout
    # plumbing so the kernel's matmul / epilogue / output stores are lane-dense.
    x_cf = jnp.transpose(x_nchw.reshape(N, C, P), (1, 0, 2)).reshape(C, N * P)

    kernel = functools.partial(_basic_block_kernel, W=W, C=C)
    vmem_limit = int(min(max(2 * _step_vmem_bytes(C, lanes, itemsize), 16 * 2**20),
                         48 * 2**20))

    out_cf = pl.pallas_call(
        kernel,
        out_shape=jax.ShapeDtypeStruct((C, N * P), x_nchw.dtype),
        grid=(N // B,),
        in_specs=[
            pl.BlockSpec((C, lanes), lambda n: (0, n)),          # x / identity slab
            pl.BlockSpec((C, 9 * C + 1), lambda n: (0, 0)),      # folded conv1 weight+bias
            pl.BlockSpec((C, 9 * C + 1), lambda n: (0, 0)),      # folded conv2 weight+bias
            pl.BlockSpec((9, lanes), lambda n: (0, 0)),          # tap-validity masks
        ],
        out_specs=pl.BlockSpec((C, lanes), lambda n: (0, n)),
        scratch_shapes=[pltpu.VMEM((9 * C + 1, lanes), mxu_dtype)],   # im2col patch
        compiler_params=pltpu.CompilerParams(
            dimension_semantics=("parallel",),
            vmem_limit_bytes=vmem_limit,
        ),
    )(x_cf, w1f, w2f, masks)

    return jnp.transpose(out_cf.reshape(C, N, P), (1, 0, 2)).reshape(N, C, H, W)


# ---------------------------------------------------------------------------
# Pure-JAX reference (HIGHEST precision so the f32 comparison bound is meaningful)
# ---------------------------------------------------------------------------
def _ref_forward(x, p, eps=1e-5):
    def conv(a, w):
        return lax.conv_general_dilated(
            a, w, window_strides=(1, 1), padding=((1, 1), (1, 1)),
            dimension_numbers=("NCHW", "OIHW", "NCHW"),
            precision=lax.Precision.HIGHEST)

    def bn(y, g, b, m, v):
        inv = g / jnp.sqrt(v + eps)
        return y * inv[None, :, None, None] + (b - m * inv)[None, :, None, None]

    out = jax.nn.relu(bn(conv(x, p["w1"]), p["bn1_gamma"], p["bn1_beta"],
                         p["bn1_mean"], p["bn1_var"]))
    out = bn(conv(out, p["w2"]), p["bn2_gamma"], p["bn2_beta"],
             p["bn2_mean"], p["bn2_var"]) + x
    return jax.nn.relu(out)


if __name__ == "__main__":
    N, C, H, W = 2, 4, 16, 16   # in_channels == out_channels == 4, stride=1
    key = jax.random.PRNGKey(0)
    ks = jax.random.split(key, 9)

    x = jax.random.normal(ks[0], (N, C, H, W), jnp.float32)

    fan_in = C * 3 * 3
    he = (2.0 / fan_in) ** 0.5
    params = {
        # Conv weights in PyTorch's OIHW layout.
        "w1": jax.random.normal(ks[1], (C, C, 3, 3), jnp.float32) * he,
        "w2": jax.random.normal(ks[2], (C, C, 3, 3), jnp.float32) * he,
        # BatchNorm params, perturbed so the folded affine path is fully exercised.
        "bn1_gamma": jnp.ones((C,), jnp.float32)
                     + 0.1 * jax.random.normal(ks[3], (C,), jnp.float32),
        "bn1_beta": 0.1 * jax.random.normal(ks[4], (C,), jnp.float32),
        "bn1_mean": 0.05 * jax.random.normal(ks[7], (C,), jnp.float32),
        "bn1_var": 1.0 + 0.1 * jnp.abs(jax.random.normal(ks[8], (C,), jnp.float32)),
        "bn2_gamma": jnp.ones((C,), jnp.float32)
                     + 0.1 * jax.random.normal(ks[5], (C,), jnp.float32),
        "bn2_beta": 0.1 * jax.random.normal(ks[6], (C,), jnp.float32),
        "bn2_mean": jnp.zeros((C,), jnp.float32),
        "bn2_var": jnp.ones((C,), jnp.float32),
    }

    ref = jax.block_until_ready(_ref_forward(x, params))

    # 1) Auto batch_block (resolves to B=2 here): whole batch folded into the lane axis.
    out_auto = jax.block_until_ready(basic_block_forward(x, params))
    # 2) batch_block=1: grid=(2,) "parallel" (v7x two-TensorCore style configuration).
    out_b1 = jax.block_until_ready(basic_block_forward(x, params, batch_block=1))
    # 3) bf16 MXU option (weights + im2col patch in bf16, f32 accumulate).
    out_bf16 = jax.block_until_ready(
        basic_block_forward(x, params, batch_block=2, mxu_dtype=jnp.bfloat16))

    for out in (out_auto, out_b1):
        assert out.shape == (N, C, H, W), out.shape
        assert out.dtype == jnp.float32
        assert bool(jnp.all(out >= 0.0))  # final ReLU
        # Tight bound for the f32 path (f32 MXU matmuls use multi-pass bf16 decomposition).
        np.testing.assert_allclose(np.asarray(out), np.asarray(ref), rtol=1e-4, atol=1e-4)

    # Loose sanity bound appropriate for two chained bf16-input MXU stages.
    assert out_bf16.shape == (N, C, H, W) and out_bf16.dtype == jnp.float32
    np.testing.assert_allclose(np.asarray(out_bf16), np.asarray(ref), rtol=1e-1, atol=1e-1)

    print("KERNEL_OK")
</pallas_src>

<mosaic_0001>
module attributes {stable_mosaic.version = 11 : i64} {
  func.func @_basic_block_kernel(%arg0: i32, %arg1: memref<4x512xf32, #tpu.memory_space<vmem>>, %arg2: memref<4x37xf32, #tpu.memory_space<vmem>>, %arg3: memref<4x37xf32, #tpu.memory_space<vmem>>, %arg4: memref<9x512xf32, #tpu.memory_space<vmem>>, %arg5: memref<4x512xf32, #tpu.memory_space<vmem>>, %arg6: memref<37x512xf32, #tpu.memory_space<vmem>>) attributes {dimension_semantics = [#tpu.dimension_semantics<parallel>], iteration_bounds = array<i64: 1>, scalar_prefetch = 0 : i64, scratch_operands = 1 : i64, tpu.core_type = #tpu.core_type<tc>, window_params = [{transform_indices = @transform_0, window_bounds = array<i64: 4, 512>}, {pipeline_mode = #tpu.pipeline_mode<synchronous>, transform_indices = @transform_1, window_bounds = array<i64: 4, 37>}, {pipeline_mode = #tpu.pipeline_mode<synchronous>, transform_indices = @transform_2, window_bounds = array<i64: 4, 37>}, {pipeline_mode = #tpu.pipeline_mode<synchronous>, transform_indices = @transform_3, window_bounds = array<i64: 9, 512>}, {transform_indices = @transform_4, window_bounds = array<i64: 4, 512>}]} {
    %c0 = arith.constant 0 : index
    %c0_0 = arith.constant 0 : index
    %0 = vector.load %arg1[%c0, %c0_0] : memref<4x512xf32, #tpu.memory_space<vmem>>, vector<4x512xf32>
    %c0_1 = arith.constant 0 : index
    %c0_2 = arith.constant 0 : index
    %1 = vector.load %arg4[%c0_1, %c0_2] : memref<9x512xf32, #tpu.memory_space<vmem>>, vector<9x512xf32>
    %cst = arith.constant 1.000000e+00 : f32
    %2 = vector.broadcast %cst : f32 to vector<1x512xf32>
    %c36 = arith.constant 36 : index
    %c0_3 = arith.constant 0 : index
    %3 = vector.load %arg6[%c36, %c0_3] : memref<37x512xf32, #tpu.memory_space<vmem>>, vector<1x512xf32>
    tpu.vector_store %arg6[%c36, %c0_3], %2 {strides = array<i32>} : memref<37x512xf32, #tpu.memory_space<vmem>>, vector<1x512xf32>,
    %c17_i32 = arith.constant 17 : i32
    %4 = tpu.dynamic_rotate %0 by %c17_i32 dim 1 : vector<4x512xf32>, i32 -> vector<4x512xf32>
    %5 = vector.extract_strided_slice %1 {offsets = [0, 0], sizes = [1, 512], strides = [1, 1]} : vector<9x512xf32> to vector<1x512xf32>
    %6 = vector.broadcast %5 : vector<1x512xf32> to vector<4x512xf32>
    %7 = arith.mulf %4, %6 : vector<4x512xf32>
    %c0_4 = arith.constant 0 : index
    %c0_5 = arith.constant 0 : index
    %8 = vector.load %arg6[%c0_4, %c0_5] : memref<37x512xf32, #tpu.memory_space<vmem>>, vector<4x512xf32>
    tpu.vector_store %arg6[%c0_4, %c0_5], %7 {strides = array<i32>} : memref<37x512xf32, #tpu.memory_space<vmem>>, vector<4x512xf32>,
    %c16_i32 = arith.constant 16 : i32
    %9 = tpu.dynamic_rotate %0 by %c16_i32 dim 1 : vector<4x512xf32>, i32 -> vector<4x512xf32>
    %10 = vector.extract_strided_slice %1 {offsets = [1, 0], sizes = [1, 512], strides = [1, 1]} : vector<9x512xf32> to vector<1x512xf32>
    %11 = vector.broadcast %10 : vector<1x512xf32> to vector<4x512xf32>
    %12 = arith.mulf %9, %11 : vector<4x512xf32>
    %c4 = arith.constant 4 : index
    %c0_6 = arith.constant 0 : index
    %13 = vector.load %arg6[%c4, %c0_6] : memref<37x512xf32, #tpu.memory_space<vmem>>, vector<4x512xf32>
    tpu.vector_store %arg6[%c4, %c0_6], %12 {strides = array<i32>} : memref<37x512xf32, #tpu.memory_space<vmem>>, vector<4x512xf32>,
    %c15_i32 = arith.constant 15 : i32
    %14 = tpu.dynamic_rotate %0 by %c15_i32 dim 1 : vector<4x512xf32>, i32 -> vector<4x512xf32>
    %15 = vector.extract_strided_slice %1 {offsets = [2, 0], sizes = [1, 512], strides = [1, 1]} : vector<9x512xf32> to vector<1x512xf32>
    %16 = vector.broadcast %15 : vector<1x512xf32> to vector<4x512xf32>
    %17 = arith.mulf %14, %16 : vector<4x512xf32>
    %c8 = arith.constant 8 : index
    %c0_7 = arith.constant 0 : index
    %18 = vector.load %arg6[%c8, %c0_7] : memref<37x512xf32, #tpu.memory_space<vmem>>, vector<4x512xf32>
    tpu.vector_store %arg6[%c8, %c0_7], %17 {strides = array<i32>} : memref<37x512xf32, #tpu.memory_space<vmem>>, vector<4x512xf32>,
    %c1_i32 = arith.constant 1 : i32
    %19 = tpu.dynamic_rotate %0 by %c1_i32 dim 1 : vector<4x512xf32>, i32 -> vector<4x512xf32>
    %20 = vector.extract_strided_slice %1 {offsets = [3, 0], sizes = [1, 512], strides = [1, 1]} : vector<9x512xf32> to vector<1x512xf32>
    %21 = vector.broadcast %20 : vector<1x512xf32> to vector<4x512xf32>
    %22 = arith.mulf %19, %21 : vector<4x512xf32>
    %c12 = arith.constant 12 : index
    %c0_8 = arith.constant 0 : index
    %23 = vector.load %arg6[%c12, %c0_8] : memref<37x512xf32, #tpu.memory_space<vmem>>, vector<4x512xf32>
    tpu.vector_store %arg6[%c12, %c0_8], %22 {strides = array<i32>} : memref<37x512xf32, #tpu.memory_space<vmem>>, vector<4x512xf32>,
    %c16 = arith.constant 16 : index
    %c0_9 = arith.constant 0 : index
    %24 = vector.load %arg6[%c16, %c0_9] : memref<37x512xf32, #tpu.memory_space<vmem>>, vector<4x512xf32>
    tpu.vector_store %arg6[%c16, %c0_9], %0 {strides = array<i32>} : memref<37x512xf32, #tpu.memory_space<vmem>>, vector<4x512xf32>,
    %c511_i32 = arith.constant 511 : i32
    %25 = tpu.dynamic_rotate %0 by %c511_i32 dim 1 : vector<4x512xf32>, i32 -> vector<4x512xf32>
    %26 = vector.extract_strided_slice %1 {offsets = [5, 0], sizes = [1, 512], strides = [1, 1]} : vector<9x512xf32> to vector<1x512xf32>
    %27 = vector.broadcast %26 : vector<1x512xf32> to vector<4x512xf32>
    %28 = arith.mulf %25, %27 : vector<4x512xf32>
    %c20 = arith.constant 20 : index
    %c0_10 = arith.constant 0 : index
    %29 = vector.load %arg6[%c20, %c0_10] : memref<37x512xf32, #tpu.memory_space<vmem>>, vector<4x512xf32>
    tpu.vector_store %arg6[%c20, %c0_10], %28 {strides = array<i32>} : memref<37x512xf32, #tpu.memory_space<vmem>>, vector<4x512xf32>,
    %c497_i32 = arith.constant 497 : i32
    %30 = tpu.dynamic_rotate %0 by %c497_i32 dim 1 : vector<4x512xf32>, i32 -> vector<4x512xf32>
    %31 = vector.extract_strided_slice %1 {offsets = [6, 0], sizes = [1, 512], strides = [1, 1]} : vector<9x512xf32> to vector<1x512xf32>
    %32 = vector.broadcast %31 : vector<1x512xf32> to vector<4x512xf32>
    %33 = arith.mulf %30, %32 : vector<4x512xf32>
    %c24 = arith.constant 24 : index
    %c0_11 = arith.constant 0 : index
    %34 = vector.load %arg6[%c24, %c0_11] : memref<37x512xf32, #tpu.memory_space<vmem>>, vector<4x512xf32>
    tpu.vector_store %arg6[%c24, %c0_11], %33 {strides = array<i32>} : memref<37x512xf32, #tpu.memory_space<vmem>>, vector<4x512xf32>,
    %c496_i32 = arith.constant 496 : i32
    %35 = tpu.dynamic_rotate %0 by %c496_i32 dim 1 : vector<4x512xf32>, i32 -> vector<4x512xf32>
    %36 = vector.extract_strided_slice %1 {offsets = [7, 0], sizes = [1, 512], strides = [1, 1]} : vector<9x512xf32> to vector<1x512xf32>
    %37 = vector.broadcast %36 : vector<1x512xf32> to vector<4x512xf32>
    %38 = arith.mulf %35, %37 : vector<4x512xf32>
    %c28 = arith.constant 28 : index
    %c0_12 = arith.constant 0 : index
    %39 = vector.load %arg6[%c28, %c0_12] : memref<37x512xf32, #tpu.memory_space<vmem>>, vector<4x512xf32>
    tpu.vector_store %arg6[%c28, %c0_12], %38 {strides = array<i32>} : memref<37x512xf32, #tpu.memory_space<vmem>>, vector<4x512xf32>,
    %c495_i32 = arith.constant 495 : i32
    %40 = tpu.dynamic_rotate %0 by %c495_i32 dim 1 : vector<4x512xf32>, i32 -> vector<4x512xf32>
    %41 = vector.extract_strided_slice %1 {offsets = [8, 0], sizes = [1, 512], strides = [1, 1]} : vector<9x512xf32> to vector<1x512xf32>
    %42 = vector.broadcast %41 : vector<1x512xf32> to vector<4x512xf32>
    %43 = arith.mulf %40, %42 : vector<4x512xf32>
    %c32 = arith.constant 32 : index
    %c0_13 = arith.constant 0 : index
    %44 = vector.load %arg6[%c32, %c0_13] : memref<37x512xf32, #tpu.memory_space<vmem>>, vector<4x512xf32>
    tpu.vector_store %arg6[%c32, %c0_13], %43 {strides = array<i32>} : memref<37x512xf32, #tpu.memory_space<vmem>>, vector<4x512xf32>,
    %c0_14 = arith.constant 0 : index
    %c0_15 = arith.constant 0 : index
    %45 = vector.load %arg2[%c0_14, %c0_15] : memref<4x37xf32, #tpu.memory_space<vmem>>, vector<4x37xf32>
    %c0_16 = arith.constant 0 : index
    %c0_17 = arith.constant 0 : index
    %46 = vector.load %arg6[%c0_16, %c0_17] : memref<37x512xf32, #tpu.memory_space<vmem>>, vector<37x512xf32>
    %cst_18 = arith.constant dense<0.000000e+00> : vector<4x512xf32>
    %47 = tpu.matmul %45, %46, %cst_18 {dimension_numbers = #tpu.dot_dimension_numbers<[1], [0], [0], [1], [0, 0, 1, 1], [], []>} : vector<4x37xf32>, vector<37x512xf32>, vector<4x512xf32> -> vector<4x512xf32>
    %cst_19 = arith.constant 0.000000e+00 : f32
    %48 = vector.broadcast %cst_19 : f32 to vector<4x512xf32>
    %49 = arith.maximumf %47, %48 : vector<4x512xf32>
    %c17_i32_20 = arith.constant 17 : i32
    %50 = tpu.dynamic_rotate %49 by %c17_i32_20 dim 1 : vector<4x512xf32>, i32 -> vector<4x512xf32>
    %51 = vector.extract_strided_slice %1 {offsets = [0, 0], sizes = [1, 512], strides = [1, 1]} : vector<9x512xf32> to vector<1x512xf32>
    %52 = vector.broadcast %51 : vector<1x512xf32> to vector<4x512xf32>
    %53 = arith.mulf %50, %52 : vector<4x512xf32>
    %c0_21 = arith.constant 0 : index
    %c0_22 = arith.constant 0 : index
    %54 = vector.load %arg6[%c0_21, %c0_22] : memref<37x512xf32, #tpu.memory_space<vmem>>, vector<4x512xf32>
    tpu.vector_store %arg6[%c0_21, %c0_22], %53 {strides = array<i32>} : memref<37x512xf32, #tpu.memory_space<vmem>>, vector<4x512xf32>,
    %c16_i32_23 = arith.constant 16 : i32
    %55 = tpu.dynamic_rotate %49 by %c16_i32_23 dim 1 : vector<4x512xf32>, i32 -> vector<4x512xf32>
    %56 = vector.extract_strided_slice %1 {offsets = [1, 0], sizes = [1, 512], strides = [1, 1]} : vector<9x512xf32> to vector<1x512xf32>
    %57 = vector.broadcast %56 : vector<1x512xf32> to vector<4x512xf32>
    %58 = arith.mulf %55, %57 : vector<4x512xf32>
    %c4_24 = arith.constant 4 : index
    %c0_25 = arith.constant 0 : index
    %59 = vector.load %arg6[%c4_24, %c0_25] : memref<37x512xf32, #tpu.memory_space<vmem>>, vector<4x512xf32>
    tpu.vector_store %arg6[%c4_24, %c0_25], %58 {strides = array<i32>} : memref<37x512xf32, #tpu.memory_space<vmem>>, vector<4x512xf32>,
    %c15_i32_26 = arith.constant 15 : i32
    %60 = tpu.dynamic_rotate %49 by %c15_i32_26 dim 1 : vector<4x512xf32>, i32 -> vector<4x512xf32>
    %61 = vector.extract_strided_slice %1 {offsets = [2, 0], sizes = [1, 512], strides = [1, 1]} : vector<9x512xf32> to vector<1x512xf32>
    %62 = vector.broadcast %61 : vector<1x512xf32> to vector<4x512xf32>
    %63 = arith.mulf %60, %62 : vector<4x512xf32>
    %c8_27 = arith.constant 8 : index
    %c0_28 = arith.constant 0 : index
    %64 = vector.load %arg6[%c8_27, %c0_28] : memref<37x512xf32, #tpu.memory_space<vmem>>, vector<4x512xf32>
    tpu.vector_store %arg6[%c8_27, %c0_28], %63 {strides = array<i32>} : memref<37x512xf32, #tpu.memory_space<vmem>>, vector<4x512xf32>,
    %c1_i32_29 = arith.constant 1 : i32
    %65 = tpu.dynamic_rotate %49 by %c1_i32_29 dim 1 : vector<4x512xf32>, i32 -> vector<4x512xf32>
    %66 = vector.extract_strided_slice %1 {offsets = [3, 0], sizes = [1, 512], strides = [1, 1]} : vector<9x512xf32> to vector<1x512xf32>
    %67 = vector.broadcast %66 : vector<1x512xf32> to vector<4x512xf32>
    %68 = arith.mulf %65, %67 : vector<4x512xf32>
    %c12_30 = arith.constant 12 : index
    %c0_31 = arith.constant 0 : index
    %69 = vector.load %arg6[%c12_30, %c0_31] : memref<37x512xf32, #tpu.memory_space<vmem>>, vector<4x512xf32>
    tpu.vector_store %arg6[%c12_30, %c0_31], %68 {strides = array<i32>} : memref<37x512xf32, #tpu.memory_space<vmem>>, vector<4x512xf32>,
    %c16_32 = arith.constant 16 : index
    %c0_33 = arith.constant 0 : index
    %70 = vector.load %arg6[%c16_32, %c0_33] : memref<37x512xf32, #tpu.memory_space<vmem>>, vector<4x512xf32>
    tpu.vector_store %arg6[%c16_32, %c0_33], %49 {strides = array<i32>} : memref<37x512xf32, #tpu.memory_space<vmem>>, vector<4x512xf32>,
    %c511_i32_34 = arith.constant 511 : i32
    %71 = tpu.dynamic_rotate %49 by %c511_i32_34 dim 1 : vector<4x512xf32>, i32 -> vector<4x512xf32>
    %72 = vector.extract_strided_slice %1 {offsets = [5, 0], sizes = [1, 512], strides = [1, 1]} : vector<9x512xf32> to vector<1x512xf32>
    %73 = vector.broadcast %72 : vector<1x512xf32> to vector<4x512xf32>
    %74 = arith.mulf %71, %73 : vector<4x512xf32>
    %c20_35 = arith.constant 20 : index
    %c0_36 = arith.constant 0 : index
    %75 = vector.load %arg6[%c20_35, %c0_36] : memref<37x512xf32, #tpu.memory_space<vmem>>, vector<4x512xf32>
    tpu.vector_store %arg6[%c20_35, %c0_36], %74 {strides = array<i32>} : memref<37x512xf32, #tpu.memory_space<vmem>>, vector<4x512xf32>,
    %c497_i32_37 = arith.constant 497 : i32
    %76 = tpu.dynamic_rotate %49 by %c497_i32_37 dim 1 : vector<4x512xf32>, i32 -> vector<4x512xf32>
    %77 = vector.extract_strided_slice %1 {offsets = [6, 0], sizes = [1, 512], strides = [1, 1]} : vector<9x512xf32> to vector<1x512xf32>
    %78 = vector.broadcast %77 : vector<1x512xf32> to vector<4x512xf32>
    %79 = arith.mulf %76, %78 : vector<4x512xf32>
    %c24_38 = arith.constant 24 : index
    %c0_39 = arith.constant 0 : index
    %80 = vector.load %arg6[%c24_38, %c0_39] : memref<37x512xf32, #tpu.memory_space<vmem>>, vector<4x512xf32>
    tpu.vector_store %arg6[%c24_38, %c0_39], %79 {strides = array<i32>} : memref<37x512xf32, #tpu.memory_space<vmem>>, vector<4x512xf32>,
    %c496_i32_40 = arith.constant 496 : i32
    %81 = tpu.dynamic_rotate %49 by %c496_i32_40 dim 1 : vector<4x512xf32>, i32 -> vector<4x512xf32>
    %82 = vector.extract_strided_slice %1 {offsets = [7, 0], sizes = [1, 512], strides = [1, 1]} : vector<9x512xf32> to vector<1x512xf32>
    %83 = vector.broadcast %82 : vector<1x512xf32> to vector<4x512xf32>
    %84 = arith.mulf %81, %83 : vector<4x512xf32>
    %c28_41 = arith.constant 28 : index
    %c0_42 = arith.constant 0 : index
    %85 = vector.load %arg6[%c28_41, %c0_42] : memref<37x512xf32, #tpu.memory_space<vmem>>, vector<4x512xf32>
    tpu.vector_store %arg6[%c28_41, %c0_42], %84 {strides = array<i32>} : memref<37x512xf32, #tpu.memory_space<vmem>>, vector<4x512xf32>,
    %c495_i32_43 = arith.constant 495 : i32
    %86 = tpu.dynamic_rotate %49 by %c495_i32_43 dim 1 : vector<4x512xf32>, i32 -> vector<4x512xf32>
    %87 = vector.extract_strided_slice %1 {offsets = [8, 0], sizes = [1, 512], strides = [1, 1]} : vector<9x512xf32> to vector<1x512xf32>
    %88 = vector.broadcast %87 : vector<1x512xf32> to vector<4x512xf32>
    %89 = arith.mulf %86, %88 : vector<4x512xf32>
    %c32_44 = arith.constant 32 : index
    %c0_45 = arith.constant 0 : index
    %90 = vector.load %arg6[%c32_44, %c0_45] : memref<37x512xf32, #tpu.memory_space<vmem>>, vector<4x512xf32>
    tpu.vector_store %arg6[%c32_44, %c0_45], %89 {strides = array<i32>} : memref<37x512xf32, #tpu.memory_space<vmem>>, vector<4x512xf32>,
    %c0_46 = arith.constant 0 : index
    %c0_47 = arith.constant 0 : index
    %91 = vector.load %arg3[%c0_46, %c0_47] : memref<4x37xf32, #tpu.memory_space<vmem>>, vector<4x37xf32>
    %c0_48 = arith.constant 0 : index
    %c0_49 = arith.constant 0 : index
    %92 = vector.load %arg6[%c0_48, %c0_49] : memref<37x512xf32, #tpu.memory_space<vmem>>, vector<37x512xf32>
    %cst_50 = arith.constant dense<0.000000e+00> : vector<4x512xf32>
    %93 = tpu.matmul %91, %92, %cst_50 {dimension_numbers = #tpu.dot_dimension_numbers<[1], [0], [0], [1], [0, 0, 1, 1], [], []>} : vector<4x37xf32>, vector<37x512xf32>, vector<4x512xf32> -> vector<4x512xf32>
    %94 = arith.addf %93, %0 : vector<4x512xf32>
    %cst_51 = arith.constant 0.000000e+00 : f32
    %95 = vector.broadcast %cst_51 : f32 to vector<4x512xf32>
    %96 = arith.maximumf %94, %95 : vector<4x512xf32>
    %c0_52 = arith.constant 0 : index
    %c0_53 = arith.constant 0 : index
    %97 = vector.load %arg5[%c0_52, %c0_53] : memref<4x512xf32, #tpu.memory_space<vmem>>, vector<4x512xf32>
    tpu.vector_store %arg5[%c0_52, %c0_53], %96 {strides = array<i32>} : memref<4x512xf32, #tpu.memory_space<vmem>>, vector<4x512xf32>,
    return
  }
  func.func @transform_0(%arg0: i32) -> (i32, i32) {
    %c0_i32 = arith.constant 0 : i32
    %c0_i32_0 = arith.constant 0 : i32
    return %c0_i32, %arg0 : i32, i32
  }
  func.func @transform_1(%arg0: i32) -> (i32, i32) {
    %c0_i32 = arith.constant 0 : i32
    %c0_i32_0 = arith.constant 0 : i32
    %c0_i32_1 = arith.constant 0 : i32
    return %c0_i32, %c0_i32_0 : i32, i32
  }
  func.func @transform_2(%arg0: i32) -> (i32, i32) {
    %c0_i32 = arith.constant 0 : i32
    %c0_i32_0 = arith.constant 0 : i32
    %c0_i32_1 = arith.constant 0 : i32
    return %c0_i32, %c0_i32_0 : i32, i32
  }
  func.func @transform_3(%arg0: i32) -> (i32, i32) {
    %c0_i32 = arith.constant 0 : i32
    %c0_i32_0 = arith.constant 0 : i32
    %c0_i32_1 = arith.constant 0 : i32
    return %c0_i32, %c0_i32_0 : i32, i32
  }
  func.func @transform_4(%arg0: i32) -> (i32, i32) {
    %c0_i32 = arith.constant 0 : i32
    %c0_i32_0 = arith.constant 0 : i32
    return %c0_i32, %arg0 : i32, i32
  }
}

</mosaic_0001>

<llo_original>
// kernel: tpu_custom_call.1
$region0: #{tpu_custom_call.1}
  #allocation0 [shape = 'u32[]', space=smem, size = 0x4, offset = 0x4, fixed_abs, tag = 'smem constant byte address 0x4 - core index']
  #allocation1 [shape = 'u32[72,128]{1,0:T(1,128)}', space=vmem, size = 0x9000, scoped, tag = 'internal scratch']
  #allocation2 [shape = 'f32[37,512]{1,0:T(8,128)}', space=vmem, size = 0x14000, scoped, tag = 'scratch operand']
  %s0 = inlined_call_operand.hbm [shape: f32[4,512], index: 0, kind: input, shape index: {}]
  %s1 = inlined_call_operand.hbm [shape: f32[4,37], index: 1, kind: input, shape index: {}]
  %s2 = inlined_call_operand.hbm [shape: f32[4,37], index: 2, kind: input, shape index: {}]
  %s3 = inlined_call_operand.hbm [shape: f32[9,512], index: 3, kind: input, shape index: {}]
  %s4 = inlined_call_operand.hbm [shape: f32[4,512], index: 4, kind: output, shape index: {}]
  %s5 = sld [smem:[#allocation0]]
  $region42: #{tpu_custom_call.1} parent=0
    _
  %s7 = ssub.s32 1, %s5
  %s8 = scalar_select 0, %s7, %s5
  $region1: #{tpu_custom_call.1} parent=0
    #allocation3 [shape = 'u8[8192]{0}', space=vmem, size = 0x2000, scoped, tag = 'input window, operand 0, single buffered']
    #allocation4 [shape = 's32[1]{0}', space=sflag, size = 0x4, scoped, tag = 'scoped memory for tpu_custom_call.1']
    #allocation5 [shape = 's32[1]{0}', space=sflag, size = 0x4, scoped, tag = 'scoped memory for tpu_custom_call.1']
    #allocation6 [shape = 'u8[2048]{0}', space=vmem, size = 0x800, scoped, tag = 'input window, operand 1, single buffered']
    #allocation7 [shape = 's32[1]{0}', space=sflag, size = 0x4, scoped, tag = 'scoped memory for tpu_custom_call.1']
    #allocation8 [shape = 'u8[2048]{0}', space=vmem, size = 0x800, scoped, tag = 'input window, operand 2, single buffered']
    #allocation9 [shape = 'u8[32768]{0}', space=vmem, size = 0x8000, scoped, tag = 'input window, operand 3, single buffered']
    #allocation10 [shape = 's32[1]{0}', space=sflag, size = 0x4, scoped, tag = 'scoped memory for tpu_custom_call.1']
    #allocation11 [shape = 'u8[8192]{0}', space=vmem, size = 0x2000, scoped, tag = 'output window, operand 0, single buffered']
    %9 = vsyncpa [#allocation4], 0
    %10 = vsyncpa [#allocation7], 0
    %11 = vsyncpa [#allocation10], 0
    %12 = vsyncpa [#allocation5], 0
    // Predicated region
    $region2: #{tpu_custom_call.1} parent=1 // pred_check
      _
    $region3: #{tpu_custom_call.1} parent=1 // pred_check_branch
      %14 = sbr.rel (0) target = $region5
    $region4: #{tpu_custom_call.1} parent=1 // pred_region
      %16 = vsyncadd [#allocation4], 0
      %s18 = sshll.u32 %s0, 4
      %s19 = int_to_ptr.hbm [resolvable:$true] %s18
      %s20 = sshll.u32 [#allocation3], 4
      %s21 = int_to_ptr.vmem [resolvable:$true] %s20
      %23 = dma.hbm_to_vmem [thread:$0]  %s19, 256, %s21, [#allocation4]
    $region5: #{tpu_custom_call.1} parent=1 // pred_fallthru
      _
    // Predicated region
    $region6: #{tpu_custom_call.1} parent=1 // pred_check
      _
    $region7: #{tpu_custom_call.1} parent=1 // pred_check_branch
      %25 = sbr.rel (0) target = $region9
    $region8: #{tpu_custom_call.1} parent=1 // pred_region
      %27 = vsyncadd [#allocation7], 0
      %s29 = sshll.u32 %s1, 4
      %s30 = int_to_ptr.hbm [resolvable:$true] %s29
      %s31 = sshll.u32 [#allocation6], 4
      %s32 = int_to_ptr.vmem [resolvable:$true] %s31
      %34 = dma.hbm_to_vmem [thread:$0]  %s30, 64, %s32, [#allocation7]
    $region9: #{tpu_custom_call.1} parent=1 // pred_fallthru
      _
    // Predicated region
    $region10: #{tpu_custom_call.1} parent=1 // pred_check
      _
    $region11: #{tpu_custom_call.1} parent=1 // pred_check_branch
      %36 = sbr.rel (0) target = $region13
    $region12: #{tpu_custom_call.1} parent=1 // pred_region
      %38 = vsyncadd [#allocation7], 0
      %s40 = sshll.u32 %s2, 4
      %s41 = int_to_ptr.hbm [resolvable:$true] %s40
      %s42 = sshll.u32 [#allocation8], 4
      %s43 = int_to_ptr.vmem [resolvable:$true] %s42
      %45 = dma.hbm_to_vmem [thread:$0]  %s41, 64, %s43, [#allocation7]
    $region13: #{tpu_custom_call.1} parent=1 // pred_fallthru
      _
    // Predicated region
    $region14: #{tpu_custom_call.1} parent=1 // pred_check
      _
    $region15: #{tpu_custom_call.1} parent=1 // pred_check_branch
      %47 = sbr.rel (0) target = $region17
    $region16: #{tpu_custom_call.1} parent=1 // pred_region
      %49 = vsyncadd [#allocation10], 0
      %s50 = sshll.u32 %s3, 4
      %s51 = int_to_ptr.hbm [resolvable:$true] %s50
      %s52 = sshll.u32 [#allocation9], 4
      %s53 = int_to_ptr.vmem [resolvable:$true] %s52
      %58 = dma.hbm_to_vmem [thread:$0]  %s51, 1024, %s53, [#allocation10], 512, 512, 32
    $region17: #{tpu_custom_call.1} parent=1 // pred_fallthru
      _
    // Predicated region
    $region18: #{tpu_custom_call.1} parent=1 // pred_check
      _
    $region19: #{tpu_custom_call.1} parent=1 // pred_check_branch
      %60 = sbr.rel (0) target = $region21
    $region20: #{tpu_custom_call.1} parent=1 // pred_region
      %62 = dma.done [#allocation4], 256
    $region21: #{tpu_custom_call.1} parent=1 // pred_fallthru
      _
    // Predicated region
    $region22: #{tpu_custom_call.1} parent=1 // pred_check
      _
    $region23: #{tpu_custom_call.1} parent=1 // pred_check_branch
      %64 = sbr.rel (0) target = $region25
    $region24: #{tpu_custom_call.1} parent=1 // pred_region
      %66 = dma.done [#allocation7], 64
    $region25: #{tpu_custom_call.1} parent=1 // pred_fallthru
      _
    // Predicated region
    $region26: #{tpu_custom_call.1} parent=1 // pred_check
      _
    $region27: #{tpu_custom_call.1} parent=1 // pred_check_branch
      %68 = sbr.rel (0) target = $region29
    $region28: #{tpu_custom_call.1} parent=1 // pred_region
      %70 = dma.done [#allocation7], 64
    $region29: #{tpu_custom_call.1} parent=1 // pred_fallthru
      _
    // Predicated region
    $region30: #{tpu_custom_call.1} parent=1 // pred_check
      _
    $region31: #{tpu_custom_call.1} parent=1 // pred_check_branch
      %72 = sbr.rel (0) target = $region33
    $region32: #{tpu_custom_call.1} parent=1 // pred_region
      %74 = dma.done [#allocation10], 1024
    $region33: #{tpu_custom_call.1} parent=1 // pred_fallthru
      _
    %v75 = vld [vmem:[#allocation3] sm:$0xff]
    %v76 = vld [vmem:[#allocation3 + $0x8] sm:$0xff]
    %v77 = vld [vmem:[#allocation9] sm:$0xff]
    %v78 = vld [vmem:[#allocation9 + $0x8] sm:$0xff]
    %v79 = vld [vmem:[#allocation9 + $0x10] sm:$0xff]
    %v80 = vld [vmem:[#allocation9 + $0x18] sm:$0xff]
    %v81 = vld [vmem:[#allocation9 + $0x20] sm:$0x1]
    %v82 = vld [vmem:[#allocation9 + $0x28] sm:$0x1]
    %v83 = vld [vmem:[#allocation9 + $0x30] sm:$0x1]
    %v84 = vld [vmem:[#allocation9 + $0x38] sm:$0x1]
    %v85 = vlaneseq
    %vm86 = vcmp.ge.s32.totalorder %v85, 0
    %vm87 = vcmp.lt.s32.totalorder %v85, 512
    %vm88 = vmand %vm86, %vm87
    %s89 = scalar_lea.vmem [#allocation2], 132
    %90 = vst.msk [vmem:[%s89] ss:$8 sm:$0xf] %vm88, 1.0
    %91 = vst.msk [vmem:[%s89] ss:$8 sm:$0x0] %vm88, 1.0
    %94 = vst [vmem:[#allocation1] ss:$2 sm:$0xff] %v75
    %s95 = scalar_lea.vmem [#allocation1], 16
    %96 = vst [vmem:[%s95] ss:$2 sm:$0xff] %v76
    %v97 = vld.sshfl [vmem:[#allocation1] sm:$0xff pattern:$0x75316420]
    %v98 = vld.sshfl [vmem:[#allocation1 + $0x8] sm:$0xff pattern:$0x75316420]
    %v99 = vld.sshfl [vmem:[#allocation1 + $0x10] sm:$0xff pattern:$0x75316420]
    %v100 = vld.sshfl [vmem:[#allocation1 + $0x18] sm:$0xff pattern:$0x75316420]
    %105 = vrot.lane.b32.xlu0 %v97, 17
    %v106 = vpop.permute.xlu0 %105
    %107 = vrot.lane.b32.xlu0 %v98, 17
    %v108 = vpop.permute.xlu0 %107
    %109 = vrot.lane.b32.xlu0 %v99, 17
    %v110 = vpop.permute.xlu0 %109
    %111 = vrot.lane.b32.xlu0 %v100, 17
    %v112 = vpop.permute.xlu0 %111
    %v113 = vlaneseq
    %v114 = vand.u32 %v113, 127
    %vm115 = vcmp.lt.s32.totalorder %v114, 17
    %v116 = vsel %vm115, %v110, %v112
    %v117 = vsel %vm115, %v108, %v110
    %v118 = vsel %vm115, %v106, %v108
    %v119 = vsel %vm115, %v112, %v106
    %v120 = vperm.slane %v77, 0
    %v121 = vperm.slane %v78, 0
    %v122 = vperm.slane %v79, 0
    %v123 = vperm.slane %v80, 0
    %v124 = vmul.f32 %v119, %v120
    %v125 = vmul.f32 %v118, %v121
    %v126 = vmul.f32 %v117, %v122
    %v127 = vmul.f32 %v116, %v123
    %128 = vst [vmem:[#allocation2] sm:$0xf] %v124
    %129 = vst [vmem:[#allocation2 + $0x8] sm:$0xf] %v125
    %130 = vst [vmem:[#allocation2 + $0x10] sm:$0xf] %v126
    %131 = vst [vmem:[#allocation2 + $0x18] sm:$0xf] %v127
    %132 = vst [vmem:[#allocation1] ss:$2 sm:$0xff] %v75
    %s133 = scalar_lea.vmem [#allocation1], 16
    %134 = vst [vmem:[%s133] ss:$2 sm:$0xff] %v76
    %v135 = vld.sshfl [vmem:[#allocation1] sm:$0xff pattern:$0x75316420]
    %v136 = vld.sshfl [vmem:[#allocation1 + $0x8] sm:$0xff pattern:$0x75316420]
    %v137 = vld.sshfl [vmem:[#allocation1 + $0x10] sm:$0xff pattern:$0x75316420]
    %v138 = vld.sshfl [vmem:[#allocation1 + $0x18] sm:$0xff pattern:$0x75316420]
    %143 = vrot.lane.b32.xlu0 %v135, 16
    %v144 = vpop.permute.xlu0 %143
    %145 = vrot.lane.b32.xlu0 %v136, 16
    %v146 = vpop.permute.xlu0 %145
    %147 = vrot.lane.b32.xlu0 %v137, 16
    %v148 = vpop.permute.xlu0 %147
    %149 = vrot.lane.b32.xlu0 %v138, 16
    %v150 = vpop.permute.xlu0 %149
    %vm151 = vcmp.lt.s32.totalorder %v114, 16
    %v152 = vsel %vm151, %v148, %v150
    %v153 = vsel %vm151, %v146, %v148
    %v154 = vsel %vm151, %v144, %v146
    %v155 = vsel %vm151, %v150, %v144
    %v156 = vperm.slane %v77, 1
    %v157 = vperm.slane %v78, 1
    %v158 = vperm.slane %v79, 1
    %v159 = vperm.slane %v80, 1
    %v160 = vmul.f32 %v155, %v156
    %v161 = vmul.f32 %v154, %v157
    %v162 = vmul.f32 %v153, %v158
    %v163 = vmul.f32 %v152, %v159
    %v168 = vrot.slane %v160, 4
    %v169 = vrot.slane %v161, 4
    %v170 = vrot.slane %v162, 4
    %v171 = vrot.slane %v163, 4
    %176 = vst [vmem:[#allocation2] sm:$0xf0] %v168
    %177 = vst [vmem:[#allocation2 + $0x8] sm:$0xf0] %v169
    %178 = vst [vmem:[#allocation2 + $0x10] sm:$0xf0] %v170
    %179 = vst [vmem:[#allocation2 + $0x18] sm:$0xf0] %v171
    %180 = vst [vmem:[#allocation1] ss:$2 sm:$0xff] %v75
    %s181 = scalar_lea.vmem [#allocation1], 16
    %182 = vst [vmem:[%s181] ss:$2 sm:$0xff] %v76
    %v183 = vld.sshfl [vmem:[#allocation1] sm:$0xff pattern:$0x75316420]
    %v184 = vld.sshfl [vmem:[#allocation1 + $0x8] sm:$0xff pattern:$0x75316420]
    %v185 = vld.sshfl [vmem:[#allocation1 + $0x10] sm:$0xff pattern:$0x75316420]
    %v186 = vld.sshfl [vmem:[#allocation1 + $0x18] sm:$0xff pattern:$0x75316420]
    %191 = vrot.lane.b32.xlu0 %v183, 15
    %v192 = vpop.permute.xlu0 %191
    %193 = vrot.lane.b32.xlu0 %v184, 15
    %v194 = vpop.permute.xlu0 %193
    %195 = vrot.lane.b32.xlu0 %v185, 15
    %v196 = vpop.permute.xlu0 %195
    %197 = vrot.lane.b32.xlu0 %v186, 15
    %v198 = vpop.permute.xlu0 %197
    %vm199 = vcmp.lt.s32.totalorder %v114, 15
    %v200 = vsel %vm199, %v196, %v198
    %v201 = vsel %vm199, %v194, %v196
    %v202 = vsel %vm199, %v192, %v194
    %v203 = vsel %vm199, %v198, %v192
    %v204 = vperm.slane %v77, 2
    %v205 = vperm.slane %v78, 2
    %v206 = vperm.slane %v79, 2
    %v207 = vperm.slane %v80, 2
    %v208 = vmul.f32 %v203, %v204
    %v209 = vmul.f32 %v202, %v205
    %v210 = vmul.f32 %v201, %v206
    %v211 = vmul.f32 %v200, %v207
    %212 = vst [vmem:[#allocation2 + $0x20] sm:$0xf] %v208
    %213 = vst [vmem:[#allocation2 + $0x28] sm:$0xf] %v209
    %214 = vst [vmem:[#allocation2 + $0x30] sm:$0xf] %v210
    %215 = vst [vmem:[#allocation2 + $0x38] sm:$0xf] %v211
    %216 = vst [vmem:[#allocation1] ss:$2 sm:$0xff] %v75
    %s217 = scalar_lea.vmem [#allocation1], 16
    %218 = vst [vmem:[%s217] ss:$2 sm:$0xff] %v76
    %v219 = vld.sshfl [vmem:[#allocation1] sm:$0xff pattern:$0x75316420]
    %v220 = vld.sshfl [vmem:[#allocation1 + $0x8] sm:$0xff pattern:$0x75316420]
    %v221 = vld.sshfl [vmem:[#allocation1 + $0x10] sm:$0xff pattern:$0x75316420]
    %v222 = vld.sshfl [vmem:[#allocation1 + $0x18] sm:$0xff pattern:$0x75316420]
    %227 = vrot.lane.b32.xlu0 %v219, 1
    %v228 = vpop.permute.xlu0 %227
    %229 = vrot.lane.b32.xlu0 %v220, 1
    %v230 = vpop.permute.xlu0 %229
    %231 = vrot.lane.b32.xlu0 %v221, 1
    %v232 = vpop.permute.xlu0 %231
    %233 = vrot.lane.b32.xlu0 %v222, 1
    %v234 = vpop.permute.xlu0 %233
    %vm235 = vcmp.lt.s32.totalorder %v114, 1
    %v236 = vsel %vm235, %v232, %v234
    %v237 = vsel %vm235, %v230, %v232
    %v238 = vsel %vm235, %v228, %v230
    %v239 = vsel %vm235, %v234, %v228
    %v240 = vperm.slane %v77, 3
    %v241 = vperm.slane %v78, 3
    %v242 = vperm.slane %v79, 3
    %v243 = vperm.slane %v80, 3
    %v244 = vmul.f32 %v239, %v240
    %v245 = vmul.f32 %v238, %v241
    %v246 = vmul.f32 %v237, %v242
    %v247 = vmul.f32 %v236, %v243
    %v252 = vrot.slane %v244, 4
    %v253 = vrot.slane %v245, 4
    %v254 = vrot.slane %v246, 4
    %v255 = vrot.slane %v247, 4
    %260 = vst [vmem:[#allocation2 + $0x20] sm:$0xf0] %v252
    %261 = vst [vmem:[#allocation2 + $0x28] sm:$0xf0] %v253
    %262 = vst [vmem:[#allocation2 + $0x30] sm:$0xf0] %v254
    %263 = vst [vmem:[#allocation2 + $0x38] sm:$0xf0] %v255
    %264 = vst [vmem:[#allocation1] ss:$2 sm:$0xff] %v75
    %s265 = scalar_lea.vmem [#allocation1], 16
    %266 = vst [vmem:[%s265] ss:$2 sm:$0xff] %v76
    %v267 = vld.sshfl [vmem:[#allocation1] sm:$0xff pattern:$0x75316420]
    %v268 = vld.sshfl [vmem:[#allocation1 + $0x8] sm:$0xff pattern:$0x75316420]
    %v269 = vld.sshfl [vmem:[#allocation1 + $0x10] sm:$0xff pattern:$0x75316420]
    %v270 = vld.sshfl [vmem:[#allocation1 + $0x18] sm:$0xff pattern:$0x75316420]
    %275 = vst [vmem:[#allocation2 + $0x40] sm:$0xf] %v267
    %276 = vst [vmem:[#allocation2 + $0x48] sm:$0xf] %v268
    %277 = vst [vmem:[#allocation2 + $0x50] sm:$0xf] %v269
    %278 = vst [vmem:[#allocation2 + $0x58] sm:$0xf] %v270
    %279 = vst [vmem:[#allocation1] ss:$2 sm:$0xff] %v75
    %s280 = scalar_lea.vmem [#allocation1], 16
    %281 = vst [vmem:[%s280] ss:$2 sm:$0xff] %v76
    %v282 = vld.sshfl [vmem:[#allocation1] sm:$0xff pattern:$0x75316420]
    %v283 = vld.sshfl [vmem:[#allocation1 + $0x8] sm:$0xff pattern:$0x75316420]
    %v284 = vld.sshfl [vmem:[#allocation1 + $0x10] sm:$0xff pattern:$0x75316420]
    %v285 = vld.sshfl [vmem:[#allocation1 + $0x18] sm:$0xff pattern:$0x75316420]
    %290 = vrot.lane.b32.xlu0 %v282, 127
    %v291 = vpop.permute.xlu0 %290
    %292 = vrot.lane.b32.xlu0 %v283, 127
    %v293 = vpop.permute.xlu0 %292
    %294 = vrot.lane.b32.xlu0 %v284, 127
    %v295 = vpop.permute.xlu0 %294
    %296 = vrot.lane.b32.xlu0 %v285, 127
    %v297 = vpop.permute.xlu0 %296
    %vm298 = vcmp.lt.s32.totalorder %v114, 127
    %v299 = vsel %vm298, %v295, %v297
    %v300 = vsel %vm298, %v293, %v295
    %v301 = vsel %vm298, %v291, %v293
    %v302 = vsel %vm298, %v297, %v291
    %v303 = vperm.slane %v77, 5
    %v304 = vperm.slane %v78, 5
    %v305 = vperm.slane %v79, 5
    %v306 = vperm.slane %v80, 5
    %v307 = vmul.f32 %v301, %v303
    %v308 = vmul.f32 %v300, %v304
    %v309 = vmul.f32 %v299, %v305
    %v310 = vmul.f32 %v302, %v306
    %v315 = vrot.slane %v307, 4
    %v316 = vrot.slane %v308, 4
    %v317 = vrot.slane %v309, 4
    %v318 = vrot.slane %v310, 4
    %323 = vst [vmem:[#allocation2 + $0x40] sm:$0xf0] %v315
    %324 = vst [vmem:[#allocation2 + $0x48] sm:$0xf0] %v316
    %325 = vst [vmem:[#allocation2 + $0x50] sm:$0xf0] %v317
    %326 = vst [vmem:[#allocation2 + $0x58] sm:$0xf0] %v318
    %327 = vst [vmem:[#allocation1] ss:$2 sm:$0xff] %v75
    %s328 = scalar_lea.vmem [#allocation1], 16
    %329 = vst [vmem:[%s328] ss:$2 sm:$0xff] %v76
    %v330 = vld.sshfl [vmem:[#allocation1] sm:$0xff pattern:$0x75316420]
    %v331 = vld.sshfl [vmem:[#allocation1 + $0x8] sm:$0xff pattern:$0x75316420]
    %v332 = vld.sshfl [vmem:[#allocation1 + $0x10] sm:$0xff pattern:$0x75316420]
    %v333 = vld.sshfl [vmem:[#allocation1 + $0x18] sm:$0xff pattern:$0x75316420]
    %338 = vrot.lane.b32.xlu0 %v330, 113
    %v339 = vpop.permute.xlu0 %338
    %340 = vrot.lane.b32.xlu0 %v331, 113
    %v341 = vpop.permute.xlu0 %340
    %342 = vrot.lane.b32.xlu0 %v332, 113
    %v343 = vpop.permute.xlu0 %342
    %344 = vrot.lane.b32.xlu0 %v333, 113
    %v345 = vpop.permute.xlu0 %344
    %vm346 = vcmp.lt.s32.totalorder %v114, 113
    %v347 = vsel %vm346, %v343, %v345
    %v348 = vsel %vm346, %v341, %v343
    %v349 = vsel %vm346, %v339, %v341
    %v350 = vsel %vm346, %v345, %v339
    %v351 = vperm.slane %v77, 6
    %v352 = vperm.slane %v78, 6
    %v353 = vperm.slane %v79, 6
    %v354 = vperm.slane %v80, 6
    %v355 = vmul.f32 %v349, %v351
    %v356 = vmul.f32 %v348, %v352
    %v357 = vmul.f32 %v347, %v353
    %v358 = vmul.f32 %v350, %v354
    %359 = vst [vmem:[#allocation2 + $0x60] sm:$0xf] %v355
    %360 = vst [vmem:[#allocation2 + $0x68] sm:$0xf] %v356
    %361 = vst [vmem:[#allocation2 + $0x70] sm:$0xf] %v357
    %362 = vst [vmem:[#allocation2 + $0x78] sm:$0xf] %v358
    %363 = vst [vmem:[#allocation1] ss:$2 sm:$0xff] %v75
    %s364 = scalar_lea.vmem [#allocation1], 16
    %365 = vst [vmem:[%s364] ss:$2 sm:$0xff] %v76
    %v366 = vld.sshfl [vmem:[#allocation1] sm:$0xff pattern:$0x75316420]
    %v367 = vld.sshfl [vmem:[#allocation1 + $0x8] sm:$0xff pattern:$0x75316420]
    %v368 = vld.sshfl [vmem:[#allocation1 + $0x10] sm:$0xff pattern:$0x75316420]
    %v369 = vld.sshfl [vmem:[#allocation1 + $0x18] sm:$0xff pattern:$0x75316420]
    %374 = vrot.lane.b32.xlu0 %v366, 112
    %v375 = vpop.permute.xlu0 %374
    %376 = vrot.lane.b32.xlu0 %v367, 112
    %v377 = vpop.permute.xlu0 %376
    %378 = vrot.lane.b32.xlu0 %v368, 112
    %v379 = vpop.permute.xlu0 %378
    %380 = vrot.lane.b32.xlu0 %v369, 112
    %v381 = vpop.permute.xlu0 %380
    %vm382 = vcmp.lt.s32.totalorder %v114, 112
    %v383 = vsel %vm382, %v379, %v381
    %v384 = vsel %vm382, %v377, %v379
    %v385 = vsel %vm382, %v375, %v377
    %v386 = vsel %vm382, %v381, %v375
    %v387 = vperm.slane %v77, 7
    %v388 = vperm.slane %v78, 7
    %v389 = vperm.slane %v79, 7
    %v390 = vperm.slane %v80, 7
    %v391 = vmul.f32 %v385, %v387
    %v392 = vmul.f32 %v384, %v388
    %v393 = vmul.f32 %v383, %v389
    %v394 = vmul.f32 %v386, %v390
    %v399 = vrot.slane %v391, 4
    %v400 = vrot.slane %v392, 4
    %v401 = vrot.slane %v393, 4
    %v402 = vrot.slane %v394, 4
    %407 = vst [vmem:[#allocation2 + $0x60] sm:$0xf0] %v399
    %408 = vst [vmem:[#allocation2 + $0x68] sm:$0xf0] %v400
    %409 = vst [vmem:[#allocation2 + $0x70] sm:$0xf0] %v401
    %410 = vst [vmem:[#allocation2 + $0x78] sm:$0xf0] %v402
    %411 = vst [vmem:[#allocation1] ss:$2 sm:$0xff] %v75
    %s412 = scalar_lea.vmem [#allocation1], 16
    %413 = vst [vmem:[%s412] ss:$2 sm:$0xff] %v76
    %v414 = vld.sshfl [vmem:[#allocation1] sm:$0xff pattern:$0x75316420]
    %v415 = vld.sshfl [vmem:[#allocation1 + $0x8] sm:$0xff pattern:$0x75316420]
    %v416 = vld.sshfl [vmem:[#allocation1 + $0x10] sm:$0xff pattern:$0x75316420]
    %v417 = vld.sshfl [vmem:[#allocation1 + $0x18] sm:$0xff pattern:$0x75316420]
    %422 = vrot.lane.b32.xlu0 %v414, 111
    %v423 = vpop.permute.xlu0 %422
    %424 = vrot.lane.b32.xlu0 %v415, 111
    %v425 = vpop.permute.xlu0 %424
    %426 = vrot.lane.b32.xlu0 %v416, 111
    %v427 = vpop.permute.xlu0 %426
    %428 = vrot.lane.b32.xlu0 %v417, 111
    %v429 = vpop.permute.xlu0 %428
    %vm430 = vcmp.lt.s32.totalorder %v114, 111
    %v431 = vsel %vm430, %v427, %v429
    %v432 = vsel %vm430, %v425, %v427
    %v433 = vsel %vm430, %v423, %v425
    %v434 = vsel %vm430, %v429, %v423
    %v435 = vperm.slane %v81, 0
    %v436 = vperm.slane %v82, 0
    %v437 = vperm.slane %v83, 0
    %v438 = vperm.slane %v84, 0
    %v439 = vmul.f32 %v433, %v435
    %v440 = vmul.f32 %v432, %v436
    %v441 = vmul.f32 %v431, %v437
    %v442 = vmul.f32 %v434, %v438
    %443 = vst [vmem:[#allocation2 + $0x80] sm:$0xf] %v439
    %444 = vst [vmem:[#allocation2 + $0x88] sm:$0xf] %v440
    %445 = vst [vmem:[#allocation2 + $0x90] sm:$0xf] %v441
    %446 = vst [vmem:[#allocation2 + $0x98] sm:$0xf] %v442
    %v447 = vld [vmem:[#allocation6] sm:$0xf]
    %v448 = vld [vmem:[#allocation2] sm:$0xff]
    %v449 = vld [vmem:[#allocation2 + $0x8] sm:$0xff]
    %v450 = vld [vmem:[#allocation2 + $0x10] sm:$0xff]
    %v451 = vld [vmem:[#allocation2 + $0x18] sm:$0xff]
    %v452 = vld [vmem:[#allocation2 + $0x20] sm:$0xff]
    %v453 = vld [vmem:[#allocation2 + $0x28] sm:$0xff]
    %v454 = vld [vmem:[#allocation2 + $0x30] sm:$0xff]
    %v455 = vld [vmem:[#allocation2 + $0x38] sm:$0xff]
    %v456 = vld [vmem:[#allocation2 + $0x40] sm:$0xff]
    %v457 = vld [vmem:[#allocation2 + $0x48] sm:$0xff]
    %v458 = vld [vmem:[#allocation2 + $0x50] sm:$0xff]
    %v459 = vld [vmem:[#allocation2 + $0x58] sm:$0xff]
    %v460 = vld [vmem:[#allocation2 + $0x60] sm:$0xff]
    %v461 = vld [vmem:[#allocation2 + $0x68] sm:$0xff]
    %v462 = vld [vmem:[#allocation2 + $0x70] sm:$0xff]
    %v463 = vld [vmem:[#allocation2 + $0x78] sm:$0xff]
    %v464 = vld [vmem:[#allocation2 + $0x80] sm:$0x1f]
    %v465 = vld [vmem:[#allocation2 + $0x88] sm:$0x1f]
    %v466 = vld [vmem:[#allocation2 + $0x90] sm:$0x1f]
    %v467 = vld [vmem:[#allocation2 + $0x98] sm:$0x1f]
    %vm468 = vcmask 302080
    %v470 = vsel %vm468, %v447, 0
    %vm472 = vcmask 1044480
    %v474 = vsel %vm472, %v464, 0
    %v477 = vsel %vm472, %v465, 0
    %v480 = vsel %vm472, %v466, 0
    %v483 = vsel %vm472, %v467, 0
    %485 = vmatpush.msra.mxu0 0.0
    %486 = vmatpush.msra.mxu0 0.0
    %487 = vmatpush.msra.mxu0 0.0
    %488 = vmatpush.msra.mxu0 0.0
    %489 = vmatpush.msra.mxu0 0.0
    %490 = vmatpush.msra.mxu0 0.0
    %491 = vmatpush.msra.mxu0 0.0
    %492 = vmatpush.msra.mxu0 0.0
    %493 = vmatpush.msra.mxu0 0.0
    %494 = vmatpush.msra.mxu0 0.0
    %495 = vmatpush.msra.mxu0 0.0
    %496 = vmatpush.msra.mxu0 %v474
    %497 = vmatpush.msra.mxu0 %v460
    %498 = vmatpush.msra.mxu0 %v456
    %499 = vmatpush.msra.mxu0 %v452
    %500 = vmatpush.msra.mxu0 %v448
    %501 = vmatmul.f32.gmra.mxu0 %v470
    %v502 = vpop.f32.mrf.mxu0
    %v503 = vadd.f32 0.0, %v502
    %504 = vdwg.mxu0
    %505 = vmatpush.msra.mxu0 0.0
    %506 = vmatpush.msra.mxu0 0.0
    %507 = vmatpush.msra.mxu0 0.0
    %508 = vmatpush.msra.mxu0 0.0
    %509 = vmatpush.msra.mxu0 0.0
    %510 = vmatpush.msra.mxu0 0.0
    %511 = vmatpush.msra.mxu0 0.0
    %512 = vmatpush.msra.mxu0 0.0
    %513 = vmatpush.msra.mxu0 0.0
    %514 = vmatpush.msra.mxu0 0.0
    %515 = vmatpush.msra.mxu0 0.0
    %516 = vmatpush.msra.mxu0 %v477
    %517 = vmatpush.msra.mxu0 %v461
    %518 = vmatpush.msra.mxu0 %v457
    %519 = vmatpush.msra.mxu0 %v453
    %520 = vmatpush.msra.mxu0 %v449
    %521 = vmatmul.f32.gmra.mxu0 %v470
    %v522 = vpop.f32.mrf.mxu0
    %v523 = vadd.f32 0.0, %v522
    %524 = vdwg.mxu0
    %525 = vmatpush.msra.mxu0 0.0
    %526 = vmatpush.msra.mxu0 0.0
    %527 = vmatpush.msra.mxu0 0.0
    %528 = vmatpush.msra.mxu0 0.0
    %529 = vmatpush.msra.mxu0 0.0
    %530 = vmatpush.msra.mxu0 0.0
    %531 = vmatpush.msra.mxu0 0.0
    %532 = vmatpush.msra.mxu0 0.0
    %533 = vmatpush.msra.mxu0 0.0
    %534 = vmatpush.msra.mxu0 0.0
    %535 = vmatpush.msra.mxu0 0.0
    %536 = vmatpush.msra.mxu0 %v480
    %537 = vmatpush.msra.mxu0 %v462
    %538 = vmatpush.msra.mxu0 %v458
    %539 = vmatpush.msra.mxu0 %v454
    %540 = vmatpush.msra.mxu0 %v450
    %541 = vmatmul.f32.gmra.mxu0 %v470
    %v542 = vpop.f32.mrf.mxu0
    %v543 = vadd.f32 0.0, %v542
    %544 = vdwg.mxu0
    %545 = vmatpush.msra.mxu0 0.0
    %546 = vmatpush.msra.mxu0 0.0
    %547 = vmatpush.msra.mxu0 0.0
    %548 = vmatpush.msra.mxu0 0.0
    %549 = vmatpush.msra.mxu0 0.0
    %550 = vmatpush.msra.mxu0 0.0
    %551 = vmatpush.msra.mxu0 0.0
    %552 = vmatpush.msra.mxu0 0.0
    %553 = vmatpush.msra.mxu0 0.0
    %554 = vmatpush.msra.mxu0 0.0
    %555 = vmatpush.msra.mxu0 0.0
    %556 = vmatpush.msra.mxu0 %v483
    %557 = vmatpush.msra.mxu0 %v463
    %558 = vmatpush.msra.mxu0 %v459
    %559 = vmatpush.msra.mxu0 %v455
    %560 = vmatpush.msra.mxu0 %v451
    %561 = vmatmul.f32.gmra.mxu0 %v470
    %v562 = vpop.f32.mrf.mxu0
    %v563 = vadd.f32 0.0, %v562
    %564 = vdwg.mxu0
    %v565 = vmax.f32 %v503, 0.0
    %v566 = vmax.f32 %v523, 0.0
    %v567 = vmax.f32 %v543, 0.0
    %v568 = vmax.f32 %v563, 0.0
    %569 = vrot.lane.b32.xlu0 %v565, 17
    %v570 = vpop.permute.xlu0 %569
    %571 = vrot.lane.b32.xlu0 %v566, 17
    %v572 = vpop.permute.xlu0 %571
    %573 = vrot.lane.b32.xlu0 %v567, 17
    %v574 = vpop.permute.xlu0 %573
    %575 = vrot.lane.b32.xlu0 %v568, 17
    %v576 = vpop.permute.xlu0 %575
    %v577 = vsel %vm115, %v574, %v576
    %v578 = vsel %vm115, %v572, %v574
    %v579 = vsel %vm115, %v570, %v572
    %v580 = vsel %vm115, %v576, %v570
    %v581 = vmul.f32 %v580, %v120
    %v582 = vmul.f32 %v579, %v121
    %v583 = vmul.f32 %v578, %v122
    %v584 = vmul.f32 %v577, %v123
    %585 = vst [vmem:[#allocation2] sm:$0xf] %v581
    %586 = vst [vmem:[#allocation2 + $0x8] sm:$0xf] %v582
    %587 = vst [vmem:[#allocation2 + $0x10] sm:$0xf] %v583
    %588 = vst [vmem:[#allocation2 + $0x18] sm:$0xf] %v584
    %589 = vrot.lane.b32.xlu0 %v565, 16
    %v590 = vpop.permute.xlu0 %589
    %591 = vrot.lane.b32.xlu0 %v566, 16
    %v592 = vpop.permute.xlu0 %591
    %593 = vrot.lane.b32.xlu0 %v567, 16
    %v594 = vpop.permute.xlu0 %593
    %595 = vrot.lane.b32.xlu0 %v568, 16
    %v596 = vpop.permute.xlu0 %595
    %v597 = vsel %vm151, %v594, %v596
    %v598 = vsel %vm151, %v592, %v594
    %v599 = vsel %vm151, %v590, %v592
    %v600 = vsel %vm151, %v596, %v590
    %v601 = vmul.f32 %v600, %v156
    %v602 = vmul.f32 %v599, %v157
    %v603 = vmul.f32 %v598, %v158
    %v604 = vmul.f32 %v597, %v159
    %v609 = vrot.slane %v601, 4
    %v610 = vrot.slane %v602, 4
    %v611 = vrot.slane %v603, 4
    %v612 = vrot.slane %v604, 4
    %617 = vst [vmem:[#allocation2] sm:$0xf0] %v609
    %618 = vst [vmem:[#allocation2 + $0x8] sm:$0xf0] %v610
    %619 = vst [vmem:[#allocation2 + $0x10] sm:$0xf0] %v611
    %620 = vst [vmem:[#allocation2 + $0x18] sm:$0xf0] %v612
    %621 = vrot.lane.b32.xlu0 %v565, 15
    %v622 = vpop.permute.xlu0 %621
    %623 = vrot.lane.b32.xlu0 %v566, 15
    %v624 = vpop.permute.xlu0 %623
    %625 = vrot.lane.b32.xlu0 %v567, 15
    %v626 = vpop.permute.xlu0 %625
    %627 = vrot.lane.b32.xlu0 %v568, 15
    %v628 = vpop.permute.xlu0 %627
    %v629 = vsel %vm199, %v626, %v628
    %v630 = vsel %vm199, %v624, %v626
    %v631 = vsel %vm199, %v622, %v624
    %v632 = vsel %vm199, %v628, %v622
    %v633 = vmul.f32 %v632, %v204
    %v634 = vmul.f32 %v631, %v205
    %v635 = vmul.f32 %v630, %v206
    %v636 = vmul.f32 %v629, %v207
    %637 = vst [vmem:[#allocation2 + $0x20] sm:$0xf] %v633
    %638 = vst [vmem:[#allocation2 + $0x28] sm:$0xf] %v634
    %639 = vst [vmem:[#allocation2 + $0x30] sm:$0xf] %v635
    %640 = vst [vmem:[#allocation2 + $0x38] sm:$0xf] %v636
    %641 = vrot.lane.b32.xlu0 %v565, 1
    %v642 = vpop.permute.xlu0 %641
    %643 = vrot.lane.b32.xlu0 %v566, 1
    %v644 = vpop.permute.xlu0 %643
    %645 = vrot.lane.b32.xlu0 %v567, 1
    %v646 = vpop.permute.xlu0 %645
    %647 = vrot.lane.b32.xlu0 %v568, 1
    %v648 = vpop.permute.xlu0 %647
    %v649 = vsel %vm235, %v646, %v648
    %v650 = vsel %vm235, %v644, %v646
    %v651 = vsel %vm235, %v642, %v644
    %v652 = vsel %vm235, %v648, %v642
    %v653 = vmul.f32 %v652, %v240
    %v654 = vmul.f32 %v651, %v241
    %v655 = vmul.f32 %v650, %v242
    %v656 = vmul.f32 %v649, %v243
    %v661 = vrot.slane %v653, 4
    %v662 = vrot.slane %v654, 4
    %v663 = vrot.slane %v655, 4
    %v664 = vrot.slane %v656, 4
    %669 = vst [vmem:[#allocation2 + $0x20] sm:$0xf0] %v661
    %670 = vst [vmem:[#allocation2 + $0x28] sm:$0xf0] %v662
    %671 = vst [vmem:[#allocation2 + $0x30] sm:$0xf0] %v663
    %672 = vst [vmem:[#allocation2 + $0x38] sm:$0xf0] %v664
    %673 = vst [vmem:[#allocation2 + $0x40] sm:$0xf] %v565
    %674 = vst [vmem:[#allocation2 + $0x48] sm:$0xf] %v566
    %675 = vst [vmem:[#allocation2 + $0x50] sm:$0xf] %v567
    %676 = vst [vmem:[#allocation2 + $0x58] sm:$0xf] %v568
    %677 = vrot.lane.b32.xlu0 %v565, 127
    %v678 = vpop.permute.xlu0 %677
    %679 = vrot.lane.b32.xlu0 %v566, 127
    %v680 = vpop.permute.xlu0 %679
    %681 = vrot.lane.b32.xlu0 %v567, 127
    %v682 = vpop.permute.xlu0 %681
    %683 = vrot.lane.b32.xlu0 %v568, 127
    %v684 = vpop.permute.xlu0 %683
    %v685 = vsel %vm298, %v682, %v684
    %v686 = vsel %vm298, %v680, %v682
    %v687 = vsel %vm298, %v678, %v680
    %v688 = vsel %vm298, %v684, %v678
    %v689 = vmul.f32 %v687, %v303
    %v690 = vmul.f32 %v686, %v304
    %v691 = vmul.f32 %v685, %v305
    %v692 = vmul.f32 %v688, %v306
    %v697 = vrot.slane %v689, 4
    %v698 = vrot.slane %v690, 4
    %v699 = vrot.slane %v691, 4
    %v700 = vrot.slane %v692, 4
    %705 = vst [vmem:[#allocation2 + $0x40] sm:$0xf0] %v697
    %706 = vst [vmem:[#allocation2 + $0x48] sm:$0xf0] %v698
    %707 = vst [vmem:[#allocation2 + $0x50] sm:$0xf0] %v699
    %708 = vst [vmem:[#allocation2 + $0x58] sm:$0xf0] %v700
    %709 = vrot.lane.b32.xlu0 %v565, 113
    %v710 = vpop.permute.xlu0 %709
    %711 = vrot.lane.b32.xlu0 %v566, 113
    %v712 = vpop.permute.xlu0 %711
    %713 = vrot.lane.b32.xlu0 %v567, 113
    %v714 = vpop.permute.xlu0 %713
    %715 = vrot.lane.b32.xlu0 %v568, 113
    %v716 = vpop.permute.xlu0 %715
    %v717 = vsel %vm346, %v714, %v716
    %v718 = vsel %vm346, %v712, %v714
    %v719 = vsel %vm346, %v710, %v712
    %v720 = vsel %vm346, %v716, %v710
    %v721 = vmul.f32 %v719, %v351
    %v722 = vmul.f32 %v718, %v352
    %v723 = vmul.f32 %v717, %v353
    %v724 = vmul.f32 %v720, %v354
    %725 = vst [vmem:[#allocation2 + $0x60] sm:$0xf] %v721
    %726 = vst [vmem:[#allocation2 + $0x68] sm:$0xf] %v722
    %727 = vst [vmem:[#allocation2 + $0x70] sm:$0xf] %v723
    %728 = vst [vmem:[#allocation2 + $0x78] sm:$0xf] %v724
    %729 = vrot.lane.b32.xlu0 %v565, 112
    %v730 = vpop.permute.xlu0 %729
    %731 = vrot.lane.b32.xlu0 %v566, 112
    %v732 = vpop.permute.xlu0 %731
    %733 = vrot.lane.b32.xlu0 %v567, 112
    %v734 = vpop.permute.xlu0 %733
    %735 = vrot.lane.b32.xlu0 %v568, 112
    %v736 = vpop.permute.xlu0 %735
    %v737 = vsel %vm382, %v734, %v736
    %v738 = vsel %vm382, %v732, %v734
    %v739 = vsel %vm382, %v730, %v732
    %v740 = vsel %vm382, %v736, %v730
    %v741 = vmul.f32 %v739, %v387
    %v742 = vmul.f32 %v738, %v388
    %v743 = vmul.f32 %v737, %v389
    %v744 = vmul.f32 %v740, %v390
    %v749 = vrot.slane %v741, 4
    %v750 = vrot.slane %v742, 4
    %v751 = vrot.slane %v743, 4
    %v752 = vrot.slane %v744, 4
    %757 = vst [vmem:[#allocation2 + $0x60] sm:$0xf0] %v749
    %758 = vst [vmem:[#allocation2 + $0x68] sm:$0xf0] %v750
    %759 = vst [vmem:[#allocation2 + $0x70] sm:$0xf0] %v751
    %760 = vst [vmem:[#allocation2 + $0x78] sm:$0xf0] %v752
    %761 = vrot.lane.b32.xlu0 %v565, 111
    %v762 = vpop.permute.xlu0 %761
    %763 = vrot.lane.b32.xlu0 %v566, 111
    %v764 = vpop.permute.xlu0 %763
    %765 = vrot.lane.b32.xlu0 %v567, 111
    %v766 = vpop.permute.xlu0 %765
    %767 = vrot.lane.b32.xlu0 %v568, 111
    %v768 = vpop.permute.xlu0 %767
    %v769 = vsel %vm430, %v766, %v768
    %v770 = vsel %vm430, %v764, %v766
    %v771 = vsel %vm430, %v762, %v764
    %v772 = vsel %vm430, %v768, %v762
    %v773 = vmul.f32 %v771, %v435
    %v774 = vmul.f32 %v770, %v436
    %v775 = vmul.f32 %v769, %v437
    %v776 = vmul.f32 %v772, %v438
    %777 = vst [vmem:[#allocation2 + $0x80] sm:$0xf] %v773
    %778 = vst [vmem:[#allocation2 + $0x88] sm:$0xf] %v774
    %779 = vst [vmem:[#allocation2 + $0x90] sm:$0xf] %v775
    %780 = vst [vmem:[#allocation2 + $0x98] sm:$0xf] %v776
    %v781 = vld [vmem:[#allocation8] sm:$0xf]
    %v782 = vld [vmem:[#allocation2] sm:$0xff]
    %v783 = vld [vmem:[#allocation2 + $0x8] sm:$0xff]
    %v784 = vld [vmem:[#allocation2 + $0x10] sm:$0xff]
    %v785 = vld [vmem:[#allocation2 + $0x18] sm:$0xff]
    %v786 = vld [vmem:[#allocation2 + $0x20] sm:$0xff]
    %v787 = vld [vmem:[#allocation2 + $0x28] sm:$0xff]
    %v788 = vld [vmem:[#allocation2 + $0x30] sm:$0xff]
    %v789 = vld [vmem:[#allocation2 + $0x38] sm:$0xff]
    %v790 = vld [vmem:[#allocation2 + $0x40] sm:$0xff]
    %v791 = vld [vmem:[#allocation2 + $0x48] sm:$0xff]
    %v792 = vld [vmem:[#allocation2 + $0x50] sm:$0xff]
    %v793 = vld [vmem:[#allocation2 + $0x58] sm:$0xff]
    %v794 = vld [vmem:[#allocation2 + $0x60] sm:$0xff]
    %v795 = vld [vmem:[#allocation2 + $0x68] sm:$0xff]
    %v796 = vld [vmem:[#allocation2 + $0x70] sm:$0xff]
    %v797 = vld [vmem:[#allocation2 + $0x78] sm:$0xff]
    %v798 = vld [vmem:[#allocation2 + $0x80] sm:$0x1f]
    %v799 = vld [vmem:[#allocation2 + $0x88] sm:$0x1f]
    %v800 = vld [vmem:[#allocation2 + $0x90] sm:$0x1f]
    %v801 = vld [vmem:[#allocation2 + $0x98] sm:$0x1f]
    %802 = vst [vmem:[#allocation1] ss:$2 sm:$0xff] %v75
    %s803 = scalar_lea.vmem [#allocation1], 16
    %804 = vst [vmem:[%s803] ss:$2 sm:$0xff] %v76
    %v805 = vld.sshfl [vmem:[#allocation1] sm:$0xff pattern:$0x75316420]
    %v806 = vld.sshfl [vmem:[#allocation1 + $0x8] sm:$0xff pattern:$0x75316420]
    %v807 = vld.sshfl [vmem:[#allocation1 + $0x10] sm:$0xff pattern:$0x75316420]
    %v808 = vld.sshfl [vmem:[#allocation1 + $0x18] sm:$0xff pattern:$0x75316420]
    %v814 = vsel %vm468, %v781, 0
    %v817 = vsel %vm472, %v798, 0
    %v820 = vsel %vm472, %v799, 0
    %v823 = vsel %vm472, %v800, 0
    %v826 = vsel %vm472, %v801, 0
    %828 = vmatpush.msra.mxu0 0.0
    %829 = vmatpush.msra.mxu0 0.0
    %830 = vmatpush.msra.mxu0 0.0
    %831 = vmatpush.msra.mxu0 0.0
    %832 = vmatpush.msra.mxu0 0.0
    %833 = vmatpush.msra.mxu0 0.0
    %834 = vmatpush.msra.mxu0 0.0
    %835 = vmatpush.msra.mxu0 0.0
    %836 = vmatpush.msra.mxu0 0.0
    %837 = vmatpush.msra.mxu0 0.0
    %838 = vmatpush.msra.mxu0 0.0
    %839 = vmatpush.msra.mxu0 %v817
    %840 = vmatpush.msra.mxu0 %v794
    %841 = vmatpush.msra.mxu0 %v790
    %842 = vmatpush.msra.mxu0 %v786
    %843 = vmatpush.msra.mxu0 %v782
    %844 = vmatmul.f32.gmra.mxu0 %v814
    %v845 = vpop.f32.mrf.mxu0
    %v846 = vadd.f32 %v805, %v845
    %847 = vdwg.mxu0
    %848 = vmatpush.msra.mxu0 0.0
    %849 = vmatpush.msra.mxu0 0.0
    %850 = vmatpush.msra.mxu0 0.0
    %851 = vmatpush.msra.mxu0 0.0
    %852 = vmatpush.msra.mxu0 0.0
    %853 = vmatpush.msra.mxu0 0.0
    %854 = vmatpush.msra.mxu0 0.0
    %855 = vmatpush.msra.mxu0 0.0
    %856 = vmatpush.msra.mxu0 0.0
    %857 = vmatpush.msra.mxu0 0.0
    %858 = vmatpush.msra.mxu0 0.0
    %859 = vmatpush.msra.mxu0 %v820
    %860 = vmatpush.msra.mxu0 %v795
    %861 = vmatpush.msra.mxu0 %v791
    %862 = vmatpush.msra.mxu0 %v787
    %863 = vmatpush.msra.mxu0 %v783
    %864 = vmatmul.f32.gmra.mxu0 %v814
    %v865 = vpop.f32.mrf.mxu0
    %v866 = vadd.f32 %v806, %v865
    %867 = vdwg.mxu0
    %868 = vmatpush.msra.mxu0 0.0
    %869 = vmatpush.msra.mxu0 0.0
    %870 = vmatpush.msra.mxu0 0.0
    %871 = vmatpush.msra.mxu0 0.0
    %872 = vmatpush.msra.mxu0 0.0
    %873 = vmatpush.msra.mxu0 0.0
    %874 = vmatpush.msra.mxu0 0.0
    %875 = vmatpush.msra.mxu0 0.0
    %876 = vmatpush.msra.mxu0 0.0
    %877 = vmatpush.msra.mxu0 0.0
    %878 = vmatpush.msra.mxu0 0.0
    %879 = vmatpush.msra.mxu0 %v823
    %880 = vmatpush.msra.mxu0 %v796
    %881 = vmatpush.msra.mxu0 %v792
    %882 = vmatpush.msra.mxu0 %v788
    %883 = vmatpush.msra.mxu0 %v784
    %884 = vmatmul.f32.gmra.mxu0 %v814
    %v885 = vpop.f32.mrf.mxu0
    %v886 = vadd.f32 %v807, %v885
    %887 = vdwg.mxu0
    %888 = vmatpush.msra.mxu0 0.0
    %889 = vmatpush.msra.mxu0 0.0
    %890 = vmatpush.msra.mxu0 0.0
    %891 = vmatpush.msra.mxu0 0.0
    %892 = vmatpush.msra.mxu0 0.0
    %893 = vmatpush.msra.mxu0 0.0
    %894 = vmatpush.msra.mxu0 0.0
    %895 = vmatpush.msra.mxu0 0.0
    %896 = vmatpush.msra.mxu0 0.0
    %897 = vmatpush.msra.mxu0 0.0
    %898 = vmatpush.msra.mxu0 0.0
    %899 = vmatpush.msra.mxu0 %v826
    %900 = vmatpush.msra.mxu0 %v797
    %901 = vmatpush.msra.mxu0 %v793
    %902 = vmatpush.msra.mxu0 %v789
    %903 = vmatpush.msra.mxu0 %v785
    %904 = vmatmul.f32.gmra.mxu0 %v814
    %v905 = vpop.f32.mrf.mxu0
    %v906 = vadd.f32 %v808, %v905
    %907 = vdwg.mxu0
    %v908 = vmax.f32 %v846, 0.0
    %v909 = vmax.f32 %v866, 0.0
    %v910 = vmax.f32 %v886, 0.0
    %v911 = vmax.f32 %v906, 0.0
    %v916 = vrot.slane %v909, 4
    %v917 = vrot.slane %v911, 4
    %vm918 = vcmask 1043456
    %v919 = vsel %vm918, %v908, %v916
    %v920 = vsel %vm918, %v910, %v917
    %923 = vst [vmem:[#allocation11] sm:$0xff] %v919
    %924 = vst [vmem:[#allocation11 + $0x8] sm:$0xff] %v920
    // Predicated region
    $region34: #{tpu_custom_call.1} parent=1 // pred_check
      _
    $region35: #{tpu_custom_call.1} parent=1 // pred_check_branch
      %926 = sbr.rel (0) target = $region37
    $region36: #{tpu_custom_call.1} parent=1 // pred_region
      %928 = vsyncadd [#allocation5], 0
      %s930 = sshll.u32 [#allocation11], 4
      %s931 = int_to_ptr.vmem [resolvable:$true] %s930
      %s932 = sshll.u32 %s4, 4
      %s933 = int_to_ptr.hbm [resolvable:$true] %s932
      %935 = dma.vmem_to_hbm [thread:$0]  %s931, 256, %s933, [#allocation5]
    $region37: #{tpu_custom_call.1} parent=1 // pred_fallthru
      _
    // Predicated region
    $region38: #{tpu_custom_call.1} parent=1 // pred_check
      _
    $region39: #{tpu_custom_call.1} parent=1 // pred_check_branch
      %937 = sbr.rel (0) target = $region41
    $region40: #{tpu_custom_call.1} parent=1 // pred_region
      %939 = dma.done [#allocation5], 256
    $region41: #{tpu_custom_call.1} parent=1 // pred_fallthru
      _
    %940 = vsyncpa [#allocation4], 1
    %941 = vsyncpa [#allocation7], 1
    %942 = vsyncpa [#allocation10], 1
    %943 = vsyncpa [#allocation5], 1

</llo_original>
